<compile_context>
chip_gen: v5e
topology: v5e:2x2
jax: 0.10.0
libtpu: 0.0.40
codegen_flags: <defaults>
</compile_context>

<pallas_src>
import jax
import jax.numpy as jnp
from jax.experimental import pallas as pl
from jax.experimental.pallas import tpu as pltpu


def _add_halves_kernel(x_ref, o_ref):
    # x_ref: (tm, N) tile; o_ref: (tm, N//2) tile.
    # Static slices; lane-aligned whenever N//2 % 128 == 0 (the common case).
    half = o_ref.shape[-1]
    o_ref[...] = x_ref[:, :half] + x_ref[:, half:]


def _sublane_multiple(dtype):
    itemsize = jnp.dtype(dtype).itemsize
    if itemsize >= 4:
        return 8
    if itemsize == 2:
        return 16
    return 32


def _vmem_budget_and_limit():
    """Generation-aware (budget_for_tiles, vmem_limit_bytes)."""
    phys = 64 * 1024 * 1024
    try:
        info = pltpu.get_tpu_info()
        phys = int(getattr(info, "vmem_capacity_bytes", phys))
    except Exception:
        pass
    if phys <= 64 * 1024 * 1024:
        # v7x-class: 64 MiB physical VMEM (32 MiB scoped default).
        return 24 * 1024 * 1024, 32 * 1024 * 1024
    # v5e / v6e: 128 MiB physical; scoped defaults are 16 / 32 MiB, so raise
    # the limit explicitly and let tiles grow.
    return 40 * 1024 * 1024, 56 * 1024 * 1024


def bilstm_add(x):
    """x: (T, B, N) with N even -> (T, B, N//2)."""
    T, B, N = x.shape
    assert N % 2 == 0, "feature dim must be even"
    half = N // 2
    R = T * B
    x2 = x.reshape(R, N)  # contiguous, free reshape

    itemsize = jnp.dtype(x.dtype).itemsize
    sub = _sublane_multiple(x.dtype)
    budget, vmem_limit = _vmem_budget_and_limit()

    # Double-buffered per-step footprint:
    #   in  (tm, N)    -> 2 * tm * N    * itemsize
    #   out (tm, half) -> 2 * tm * half * itemsize
    # = 6 * tm * half * itemsize   (since N == 2 * half)
    tm_cap = max(sub, (budget // (6 * half * itemsize)) // sub * sub)

    if R <= sub:
        # Block dim == full array dim is always a legal layout.
        tm = R
    else:
        # Cap at ceil(R/2) (rounded up to the sublane multiple) so the grid
        # has >= 2 steps -> both v7x TensorCores get work via "parallel".
        half_rows = -(-R // 2)
        half_rows = -(-half_rows // sub) * sub
        tm = min(tm_cap, 8192, half_rows)

    grid = (pl.cdiv(R, tm),)

    # Make the explicit VMEM limit always cover the real step footprint
    # (guards the extremely-wide-feature corner case where tm_cap floors at
    # one sublane tile and exceeds the nominal budget).
    step_bytes = 2 * tm * (N + half) * itemsize
    vmem_limit = max(vmem_limit, step_bytes + 4 * 1024 * 1024)

    out2 = pl.pallas_call(
        _add_halves_kernel,
        out_shape=jax.ShapeDtypeStruct((R, half), x.dtype),
        grid=grid,
        in_specs=[pl.BlockSpec((tm, N), lambda i: (i, 0))],
        out_specs=pl.BlockSpec((tm, half), lambda i: (i, 0)),
        compiler_params=pltpu.CompilerParams(
            dimension_semantics=("parallel",),
            vmem_limit_bytes=vmem_limit,
        ),
    )(x2)

    return out2.reshape(T, B, half)


if __name__ == "__main__":
    # Small shapes consistent with a BiLSTM output: seq=8, batch=2, 2*hidden=256.
    T, B, N = 8, 2, 256
    key = jax.random.PRNGKey(0)
    x = jax.random.normal(key, (T, B, N), dtype=jnp.float32)

    out = bilstm_add(x)
    out = jax.block_until_ready(out)

    # Reference check in plain JAX.
    ref = x[:, :, : N // 2] + x[:, :, N // 2 :]
    assert out.shape == (T, B, N // 2)
    assert jnp.allclose(out, ref, atol=1e-6), "mismatch vs reference"

    print("KERNEL_OK")
</pallas_src>

<mosaic_0001>
module attributes {stable_mosaic.version = 11 : i64} {
  func.func @_add_halves_kernel(%arg0: i32, %arg1: memref<8x256xf32, #tpu.memory_space<vmem>>, %arg2: memref<8x128xf32, #tpu.memory_space<vmem>>) attributes {dimension_semantics = [#tpu.dimension_semantics<parallel>], iteration_bounds = array<i64: 2>, scalar_prefetch = 0 : i64, scratch_operands = 0 : i64, tpu.core_type = #tpu.core_type<tc>, window_params = [{transform_indices = @transform_0, window_bounds = array<i64: 8, 256>}, {transform_indices = @transform_1, window_bounds = array<i64: 8, 128>}]} {
    %c0 = arith.constant 0 : index
    %c0_0 = arith.constant 0 : index
    %0 = vector.load %arg1[%c0, %c0_0] : memref<8x256xf32, #tpu.memory_space<vmem>>, vector<8x128xf32>
    %c0_1 = arith.constant 0 : index
    %c128 = arith.constant 128 : index
    %1 = vector.load %arg1[%c0_1, %c128] : memref<8x256xf32, #tpu.memory_space<vmem>>, vector<8x128xf32>
    %2 = arith.addf %0, %1 : vector<8x128xf32>
    %c0_2 = arith.constant 0 : index
    %c0_3 = arith.constant 0 : index
    %3 = vector.load %arg2[%c0_2, %c0_3] : memref<8x128xf32, #tpu.memory_space<vmem>>, vector<8x128xf32>
    tpu.vector_store %arg2[%c0_2, %c0_3], %2 {strides = array<i32>} : memref<8x128xf32, #tpu.memory_space<vmem>>, vector<8x128xf32>,
    return
  }
  func.func @transform_0(%arg0: i32) -> (i32, i32) {
    %c0_i32 = arith.constant 0 : i32
    %c0_i32_0 = arith.constant 0 : i32
    return %arg0, %c0_i32 : i32, i32
  }
  func.func @transform_1(%arg0: i32) -> (i32, i32) {
    %c0_i32 = arith.constant 0 : i32
    %c0_i32_0 = arith.constant 0 : i32
    return %arg0, %c0_i32 : i32, i32
  }
}

</mosaic_0001>

<llo_original>
// kernel: tpu_custom_call.1
$region0: #{tpu_custom_call.1}
  #allocation0 [shape = 'u32[]', space=smem, size = 0x4, offset = 0x4, fixed_abs, tag = 'smem constant byte address 0x4 - core index']
  #allocation1 [shape = 'u32[72,128]{1,0:T(1,128)}', space=vmem, size = 0x9000, scoped, tag = 'internal scratch']
  %s0 = inlined_call_operand.hbm [shape: f32[16,256], index: 0, kind: input, shape index: {}]
  %s1 = inlined_call_operand.hbm [shape: f32[16,128], index: 1, kind: output, shape index: {}]
  %s2 = sld [smem:[#allocation0]]
  $region41: #{tpu_custom_call.1} parent=0
    _
  %s4 = ssub.s32 1, %s2
  %s5 = scalar_select 0, %s4, %s2
  $region1: #{tpu_custom_call.1} parent=0
    #allocation2 [shape = 'u8[16384]{0}', space=vmem, size = 0x4000, scoped, tag = 'input window, operand 0']
    #allocation3 [shape = 's32[2]{0}', space=sflag, size = 0x8, scoped, tag = 'scoped memory for tpu_custom_call.1']
    #allocation4 [shape = 's32[2]{0}', space=sflag, size = 0x8, scoped, tag = 'scoped memory for tpu_custom_call.1']
    #allocation5 [shape = 'u8[8192]{0}', space=vmem, size = 0x2000, scoped, tag = 'output window, operand 0']
    %6 = vsyncpa [#allocation3], 0
    %s7 = scalar_lea.sflag [#allocation3], 1
    %8 = vsyncpa %s7, 0
    %9 = vsyncpa [#allocation4], 0
    %s10 = scalar_lea.sflag [#allocation4], 1
    %11 = vsyncpa %s10, 0
    loop: start=0, step=1, limit=4
    $region2: #{tpu_custom_call.1} parent=1 // loop_pre_header
      _
    $region3: #{tpu_custom_call.1} parent=1 // loop_header
      %s13 = sphi 0, %s17
      %p14 = scmp.ge.s32.totalorder %s13, 4
      %s23 = sphi 0, %s25
      %s26 = sphi 0, %s23
      %s27 = sphi 0, %s26
      %s43 = sphi 0, %s27
      %s49 = sphi 0, %s51
      %s52 = sphi 0, %s49
      %s53 = sphi 0, %s52
      %s69 = sphi 0, %s53
    $region4: #{tpu_custom_call.1} parent=1 // loop_header_branch
      %16 = sbr.rel (%p14) target = $region8
    $region5: #{tpu_custom_call.1} parent=1 // loop_body
      %s18 = ssub.s32 %s13, 1
      %s19 = ssub.s32 %s13, 2
      %s20 = sadd.s32 %s13, 1
      %s21 = ssub.s32 %s13, %s20
      %p22 = scmp.eq.s32.totalorder %s21, 0
      %s24 = sadd.s32 %s23, 1
      %s25 = scalar_select %p22, %s23, %s24
      %p28 = pneg %p22
      %p29 = scmp.eq.s32.totalorder %s13, 1
      %p30 = por %p28, %p29
      %p31 = scmp.ne.s32.totalorder %s23, %s26
      %p32 = scmp.eq.s32.totalorder %s13, 0
      %p33 = por %p31, %p32
      %p34 = scmp.ne.s32.totalorder %s23, %s26
      %p35 = scmp.eq.s32.totalorder %s18, 1
      %p36 = por %p34, %p35
      %p37 = scmp.ne.s32.totalorder %s26, %s27
      %p38 = scmp.eq.s32.totalorder %s18, 0
      %p39 = por %p37, %p38
      %p40 = scmp.ne.s32.totalorder %s26, %s27
      %p41 = scmp.eq.s32.totalorder %s19, 1
      %p42 = por %p40, %p41
      %p44 = scmp.ne.s32.totalorder %s27, %s43
      %p45 = scmp.eq.s32.totalorder %s19, 0
      %p46 = por %p44, %p45
      %s47 = ssub.s32 %s13, %s20
      %p48 = scmp.eq.s32.totalorder %s47, 0
      %s50 = sadd.s32 %s49, 1
      %s51 = scalar_select %p48, %s49, %s50
      %p54 = pneg %p48
      %p55 = scmp.eq.s32.totalorder %s13, 1
      %p56 = por %p54, %p55
      %p57 = scmp.ne.s32.totalorder %s49, %s52
      %p58 = scmp.eq.s32.totalorder %s13, 0
      %p59 = por %p57, %p58
      %p60 = scmp.ne.s32.totalorder %s49, %s52
      %p61 = scmp.eq.s32.totalorder %s18, 1
      %p62 = por %p60, %p61
      %p63 = scmp.ne.s32.totalorder %s52, %s53
      %p64 = scmp.eq.s32.totalorder %s18, 0
      %p65 = por %p63, %p64
      %p66 = scmp.ne.s32.totalorder %s52, %s53
      %p67 = scmp.eq.s32.totalorder %s19, 1
      %p68 = por %p66, %p67
      %p70 = scmp.ne.s32.totalorder %s53, %s69
      %p71 = scmp.eq.s32.totalorder %s19, 0
      %p72 = por %p70, %p71
      %p73 = scmp.le.s32.totalorder 1, %s13
      %p74 = scmp.lt.s32.totalorder %s13, 3
      %p75 = pnand %p73, %p74
      %p76 = pneg %p75
      // Predicated region
      $region9: #{tpu_custom_call.1} parent=5 // pred_check
        _
      $region10: #{tpu_custom_call.1} parent=5 // pred_check_branch
        %78 = sbr.rel (%p75) target = $region12
      $region11: #{tpu_custom_call.1} parent=5 // pred_region
        %s79 = ssub.s32 %s13, 1
      $region12: #{tpu_custom_call.1} parent=5 // pred_fallthru
        _
      %p80 = scmp.lt.s32.totalorder %s13, 2
      // Predicated region
      $region13: #{tpu_custom_call.1} parent=5 // pred_check
        %p81 = pneg %p80
      $region14: #{tpu_custom_call.1} parent=5 // pred_check_branch
        %83 = sbr.rel (%p81) target = $region16
      $region15: #{tpu_custom_call.1} parent=5 // pred_region
        // Predicated region
        $region17: #{tpu_custom_call.1} parent=15 // pred_check
          %p84 = pneg %p33
        $region18: #{tpu_custom_call.1} parent=15 // pred_check_branch
          %86 = sbr.rel (%p84) target = $region20
        $region19: #{tpu_custom_call.1} parent=15 // pred_region
          %s87 = sand.u32 %s23, 1
          %s88 = scalar_lea.sflag [#allocation3], %s87
          %s89 = sand.u32 %s23, 1
          %s90 = smul.addr %s89, 16
          %s91 = scalar_lea.vmem [#allocation2], %s90
          %93 = vsyncadd %s88, 0
          %s94 = smul.addr %s13, 2
          %s95 = smul.addr %s94, 8
          %s96 = scalar_lea.hbm %s0, %s95
          %s98 = sshll.u32 %s96, 4
          %s99 = int_to_ptr.hbm [resolvable:$true] %s98
          %s100 = sshll.u32 %s91, 4
          %s101 = int_to_ptr.vmem [resolvable:$true] %s100
          %103 = dma.hbm_to_vmem [thread:$0]  %s99, 256, %s101, %s88
        $region20: #{tpu_custom_call.1} parent=15 // pred_fallthru
          _
      $region16: #{tpu_custom_call.1} parent=5 // pred_fallthru
        _
      %p104 = scmp.le.s32.totalorder 1, %s13
      %p105 = scmp.lt.s32.totalorder %s13, 3
      %p106 = pnand %p104, %p105
      %p107 = pneg %p106
      // Predicated region
      $region21: #{tpu_custom_call.1} parent=5 // pred_check
        _
      $region22: #{tpu_custom_call.1} parent=5 // pred_check_branch
        %109 = sbr.rel (%p106) target = $region24
      $region23: #{tpu_custom_call.1} parent=5 // pred_region
        %s110 = ssub.s32 %s13, 1
        %s111 = sand.u32 %s26, 1
        %s112 = scalar_lea.sflag [#allocation3], %s111
        %s113 = sand.u32 %s26, 1
        %s114 = smul.addr %s113, 16
        %s115 = scalar_lea.vmem [#allocation2], %s114
        // Predicated region
        $region25: #{tpu_custom_call.1} parent=23 // pred_check
          %p116 = pneg %p39
        $region26: #{tpu_custom_call.1} parent=23 // pred_check_branch
          %118 = sbr.rel (%p116) target = $region28
        $region27: #{tpu_custom_call.1} parent=23 // pred_region
          %120 = dma.done %s112, 256
        $region28: #{tpu_custom_call.1} parent=23 // pred_fallthru
          _
        %s121 = sand.u32 %s26, 1
        %s122 = scalar_lea.sflag [#allocation3], %s121
        %s123 = sand.u32 %s26, 1
        %s124 = smul.addr %s123, 16
        %s125 = scalar_lea.vmem [#allocation2], %s124
        %p126 = pneg %p39
        %p127 = pneg %p36
        %p128 = pneg %p65
        %p129 = pneg %p62
        %s130 = sand.u32 %s52, 1
        %s131 = scalar_lea.sflag [#allocation4], %s130
        %s132 = sand.u32 %s52, 1
        %s133 = smul.addr %s132, 8
        %s134 = scalar_lea.vmem [#allocation5], %s133
        %v135 = vld [vmem:[%s115] sm:$0xff]
        %v136 = vld [vmem:[%s115 + $0x8] sm:$0xff]
        %v137 = vadd.f32 %v135, %v136
        %138 = vst [vmem:[%s134] sm:$0xff] %v137
        %s139 = sand.u32 %s52, 1
        %s140 = scalar_lea.sflag [#allocation4], %s139
        %s141 = sand.u32 %s52, 1
        %s142 = smul.addr %s141, 8
        %s143 = scalar_lea.vmem [#allocation5], %s142
        // Predicated region
        $region29: #{tpu_custom_call.1} parent=23 // pred_check
          %p144 = pneg %p62
        $region30: #{tpu_custom_call.1} parent=23 // pred_check_branch
          %146 = sbr.rel (%p144) target = $region32
        $region31: #{tpu_custom_call.1} parent=23 // pred_region
          %148 = vsyncadd %s140, 0
          %s149 = smul.addr %s18, 8
          %s150 = scalar_lea.hbm %s1, %s149
          %s152 = sshll.u32 %s143, 4
          %s153 = int_to_ptr.vmem [resolvable:$true] %s152
          %s154 = sshll.u32 %s150, 4
          %s155 = int_to_ptr.hbm [resolvable:$true] %s154
          %157 = dma.vmem_to_hbm [thread:$0]  %s153, 128, %s155, %s140
        $region32: #{tpu_custom_call.1} parent=23 // pred_fallthru
          _
      $region24: #{tpu_custom_call.1} parent=5 // pred_fallthru
        _
      %p158 = scmp.le.s32.totalorder 2, %s13
      // Predicated region
      $region33: #{tpu_custom_call.1} parent=5 // pred_check
        %p159 = pneg %p158
      $region34: #{tpu_custom_call.1} parent=5 // pred_check_branch
        %161 = sbr.rel (%p159) target = $region36
      $region35: #{tpu_custom_call.1} parent=5 // pred_region
        %s162 = ssub.s32 %s13, 2
        // Predicated region
        $region37: #{tpu_custom_call.1} parent=35 // pred_check
          %p163 = pneg %p68
        $region38: #{tpu_custom_call.1} parent=35 // pred_check_branch
          %165 = sbr.rel (%p163) target = $region40
        $region39: #{tpu_custom_call.1} parent=35 // pred_region
          %s166 = sand.u32 %s53, 1
          %s167 = scalar_lea.sflag [#allocation4], %s166
          %s168 = sand.u32 %s53, 1
          %s169 = smul.addr %s168, 8
          %s170 = scalar_lea.vmem [#allocation5], %s169
          %172 = dma.done %s167, 128
        $region40: #{tpu_custom_call.1} parent=35 // pred_fallthru
          _
      $region36: #{tpu_custom_call.1} parent=5 // pred_fallthru
        _
    $region6: #{tpu_custom_call.1} parent=1 // loop_footer
      %s17 = sadd.s32 1, %s13
    $region7: #{tpu_custom_call.1} parent=1 // loop_footer_branch
      %12 = sbr.rel target = $region3
    $region8: #{tpu_custom_call.1} parent=1 // loop_exit
      _
    %173 = vsyncpa [#allocation3], 1
    %s174 = scalar_lea.sflag [#allocation3], 1
    %175 = vsyncpa %s174, 1
    %176 = vsyncpa [#allocation4], 1
    %s177 = scalar_lea.sflag [#allocation4], 1
    %178 = vsyncpa %s177, 1

</llo_original>
